<compile_context>
chip_gen: v5e
topology: v5e:2x2
jax: 0.10.0
libtpu: 0.0.40
codegen_flags: <defaults>
</compile_context>

<pallas_src>
import functools

import jax
import jax.numpy as jnp
from jax.experimental import pallas as pl
from jax.experimental.pallas import tpu as pltpu

_MIB = 1024 * 1024


def _cdiv(a, b):
    return -(-a // b)


def _round_up(x, m):
    return _cdiv(x, m) * m


def _sublane_tile(dtype):
    # Native sublane tile: 8 for 4-byte, 16 for 2-byte, 32 for 1-byte dtypes.
    return max(8, 32 // jnp.dtype(dtype).itemsize)


@functools.lru_cache(maxsize=None)
def _tpu_config():
    """Generation-aware block size, buffer depth and VMEM limit."""
    vmem_bytes = 64 * _MIB  # conservative default (v7x per-TC VMEM)
    kind = ""
    try:
        info = pltpu.get_tpu_info()
        vmem_bytes = int(getattr(info, "vmem_capacity_bytes", vmem_bytes))
    except Exception:
        pass
    try:
        kind = jax.devices()[0].device_kind.lower()
    except Exception:
        pass

    big_vmem = vmem_bytes >= 96 * _MIB  # v5e / v6e have 128 MiB physical VMEM
    is_v5 = "v5" in kind

    if big_vmem:
        # v5e/v6e: large VMEM -> big blocks, deep buffering, generous limit.
        # 3 buffers x 2 arrays x 8 MiB = 48 MiB resident <= 96 MiB limit.
        return dict(block_bytes=8 * _MIB, buffers=3, vmem_limit=96 * _MIB,
                    multi_core=False, is_v5=is_v5)
    # v7x (or unknown): 64 MiB per-TC VMEM.
    # 3 buffers x 2 arrays x 6 MiB = 36 MiB resident (~0.56 of 64 MiB);
    # 44 MiB limit leaves headroom for compiler-internal scratch.
    return dict(block_bytes=6 * _MIB, buffers=3, vmem_limit=44 * _MIB,
                multi_core=True, is_v5=is_v5)


def _swish_kernel(x_ref, o_ref, *, beta, compute_dtype):
    x = x_ref[...].astype(compute_dtype)
    # sigmoid goes to the EUP (its own bundle slot) - effectively free for a
    # memory-bound elementwise kernel.
    y = x * jax.nn.sigmoid(x * beta)
    o_ref[...] = y.astype(o_ref.dtype)


def _block_spec(tr, C, buffers):
    if buffers != 2:
        try:
            return pl.BlockSpec((tr, C), lambda i: (i, 0),
                                pipeline_mode=pl.Buffered(buffers))
        except TypeError:
            pass  # older API without pipeline_mode: fall back to default depth
    return pl.BlockSpec((tr, C), lambda i: (i, 0))


def _swish_2d(x2, beta, compute_dtype, cfg):
    """Elementwise kernel over a lane-dense (R, C) slab (C % 128 == 0, or a
    single full-extent block for small inputs)."""
    R, C = x2.shape
    dtype = x2.dtype
    itemsize = jnp.dtype(dtype).itemsize
    sub = _sublane_tile(dtype)
    total_bytes = R * C * itemsize
    block_bytes = cfg["block_bytes"]

    if total_bytes <= block_bytes:
        # Small input: one block equal to the full array dims (always legal,
        # even if not (8,128)-divisible). No padding, no per-step overhead.
        tr = R
        grid = (1,)
        buffers = 2  # nothing to pipeline with a single step
    else:
        # Multi-MiB row tiles, rounded to the dtype's sublane tile so stores
        # stay unmasked. C is a multiple of 128, rows are contiguous.
        tr = (block_bytes // (C * itemsize)) // sub * sub
        tr = max(sub, min(tr, _round_up(R, sub)))
        if cfg["multi_core"]:
            # Make sure both v7x TensorCores get work: aim for >= 8 grid
            # steps as long as blocks stay >= ~1 MiB.
            if _cdiv(R, tr) < 8:
                min_tr = max(sub, _round_up(_cdiv(1 * _MIB, C * itemsize), sub))
                tr_target = max(sub, _round_up(_cdiv(R, 8), sub))
                tr = max(min_tr, min(tr, tr_target))
        grid = (pl.cdiv(R, tr),)
        buffers = cfg["buffers"]

    n = R * C
    cost = pl.CostEstimate(flops=4 * n, transcendentals=n,
                           bytes_accessed=2 * n * itemsize)

    return pl.pallas_call(
        functools.partial(_swish_kernel, beta=float(beta),
                          compute_dtype=compute_dtype),
        out_shape=jax.ShapeDtypeStruct((R, C), dtype),
        grid_spec=pltpu.PrefetchScalarGridSpec(
            num_scalar_prefetch=0,
            grid=grid,
            in_specs=[_block_spec(tr, C, buffers)],
            out_specs=_block_spec(tr, C, buffers),
        ),
        compiler_params=pltpu.CompilerParams(
            dimension_semantics=("parallel",),
            vmem_limit_bytes=cfg["vmem_limit"],
        ),
        cost_estimate=cost,
    )(x2)


def swish(x, beta=1.0):
    """Elementwise Swish on an NCHW (or any-shape) array via a Pallas kernel."""
    orig_shape = x.shape
    dtype = x.dtype
    assert jnp.issubdtype(dtype, jnp.floating), (
        "Swish kernel expects a floating dtype, got %s" % dtype)

    size = int(x.size)
    if size == 0:
        return x

    cfg = _tpu_config()

    # bf16/f16 compute natively on v6e/v7x (bf16 VPU/EUP); f32 everywhere else.
    if (dtype == jnp.bfloat16 or dtype == jnp.float16) and not cfg["is_v5"]:
        compute_dtype = dtype
    else:
        compute_dtype = jnp.float32

    # Lane-dense factorization: last dim is the largest multiple of 128
    # (<= 4096) dividing the element count while keeping at least a full
    # sublane tile of rows. Reshape of a contiguous array is metadata-only.
    sub = _sublane_tile(dtype)
    cols = None
    for c in (4096, 2048, 1024, 512, 256, 128):
        if size % c == 0 and size // c >= sub:
            cols = c
            break
    if cols is None and size % 128 == 0:
        cols = 128  # tiny input: fewer rows than a sublane tile, single block

    if cols is not None:
        out = _swish_2d(x.reshape(size // cols, cols), beta, compute_dtype, cfg)
        return out.reshape(orig_shape)

    # Rare ragged fallback: kernel on the largest multiple-of-128 prefix,
    # plain jnp on the (<128-element) tail. Avoids the pad+slice extra passes.
    flat = x.reshape(-1)
    main = size - (size % 128)
    tail = flat[main:].astype(compute_dtype)
    tail_out = (tail * jax.nn.sigmoid(tail * float(beta))).astype(dtype)
    if main == 0:
        return tail_out.reshape(orig_shape)
    main_out = _swish_2d(flat[:main].reshape(main // 128, 128), beta,
                         compute_dtype, cfg)
    return jnp.concatenate([main_out.reshape(-1), tail_out]).reshape(orig_shape)


if __name__ == "__main__":
    key = jax.random.PRNGKey(0)
    # NCHW input, like the PyTorch module would receive.
    x = jax.random.normal(key, (2, 4, 16, 16), dtype=jnp.float32)

    beta = 1.0
    y = swish(x, beta=beta)
    y = jax.block_until_ready(y)

    # Reference check against plain JAX (f32 compute path -> tight tolerance).
    ref = x * jax.nn.sigmoid(beta * x)
    assert y.shape == x.shape and y.dtype == x.dtype
    assert jnp.allclose(y, ref, atol=1e-6, rtol=1e-6)

    print("KERNEL_OK")
</pallas_src>

<mosaic_0001>
module attributes {stable_mosaic.version = 11 : i64} {
  func.func @_swish_kernel(%arg0: i32, %arg1: memref<8x256xf32, #tpu.memory_space<vmem>>, %arg2: memref<8x256xf32, #tpu.memory_space<vmem>>) attributes {dimension_semantics = [#tpu.dimension_semantics<parallel>], iteration_bounds = array<i64: 1>, scalar_prefetch = 0 : i64, scratch_operands = 0 : i64, tpu.core_type = #tpu.core_type<tc>, window_params = [{transform_indices = @transform_0, window_bounds = array<i64: 8, 256>}, {transform_indices = @transform_1, window_bounds = array<i64: 8, 256>}]} {
    %c0 = arith.constant 0 : index
    %c0_0 = arith.constant 0 : index
    %0 = vector.load %arg1[%c0, %c0_0] : memref<8x256xf32, #tpu.memory_space<vmem>>, vector<8x256xf32>
    %cst = arith.constant 1.000000e+00 : f32
    %1 = vector.broadcast %cst : f32 to vector<8x256xf32>
    %2 = arith.mulf %0, %1 : vector<8x256xf32>
    %3 = arith.negf %2 : vector<8x256xf32>
    %4 = math.exp %3 : vector<8x256xf32>
    %cst_1 = arith.constant 1.000000e+00 : f32
    %5 = vector.broadcast %cst_1 : f32 to vector<8x256xf32>
    %6 = arith.addf %5, %4 : vector<8x256xf32>
    %7 = arith.divf %5, %6 : vector<8x256xf32>
    %8 = arith.mulf %0, %7 : vector<8x256xf32>
    %c0_2 = arith.constant 0 : index
    %c0_3 = arith.constant 0 : index
    %9 = vector.load %arg2[%c0_2, %c0_3] : memref<8x256xf32, #tpu.memory_space<vmem>>, vector<8x256xf32>
    tpu.vector_store %arg2[%c0_2, %c0_3], %8 {strides = array<i32>} : memref<8x256xf32, #tpu.memory_space<vmem>>, vector<8x256xf32>,
    return
  }
  func.func @transform_0(%arg0: i32) -> (i32, i32) {
    %c0_i32 = arith.constant 0 : i32
    %c0_i32_0 = arith.constant 0 : i32
    return %arg0, %c0_i32 : i32, i32
  }
  func.func @transform_1(%arg0: i32) -> (i32, i32) {
    %c0_i32 = arith.constant 0 : i32
    %c0_i32_0 = arith.constant 0 : i32
    return %arg0, %c0_i32 : i32, i32
  }
}

</mosaic_0001>

<llo_original>
// kernel: tpu_custom_call.1
$region0: #{tpu_custom_call.1}
  #allocation0 [shape = 'u32[]', space=smem, size = 0x4, offset = 0x4, fixed_abs, tag = 'smem constant byte address 0x4 - core index']
  #allocation1 [shape = 'u32[72,128]{1,0:T(1,128)}', space=vmem, size = 0x9000, scoped, tag = 'internal scratch']
  %s0 = inlined_call_operand.hbm [shape: f32[8,256], index: 0, kind: input, shape index: {}]
  %s1 = inlined_call_operand.hbm [shape: f32[8,256], index: 1, kind: output, shape index: {}]
  %s2 = sld [smem:[#allocation0]]
  $region18: #{tpu_custom_call.1} parent=0
    _
  %s4 = ssub.s32 1, %s2
  %s5 = scalar_select 0, %s4, %s2
  $region1: #{tpu_custom_call.1} parent=0
    #allocation2 [shape = 'u8[8192]{0}', space=vmem, size = 0x2000, scoped, tag = 'input window, operand 0, single buffered']
    #allocation3 [shape = 's32[1]{0}', space=sflag, size = 0x4, scoped, tag = 'scoped memory for tpu_custom_call.1']
    #allocation4 [shape = 's32[1]{0}', space=sflag, size = 0x4, scoped, tag = 'scoped memory for tpu_custom_call.1']
    #allocation5 [shape = 'u8[8192]{0}', space=vmem, size = 0x2000, scoped, tag = 'output window, operand 0, single buffered']
    %6 = vsyncpa [#allocation3], 0
    %7 = vsyncpa [#allocation4], 0
    // Predicated region
    $region2: #{tpu_custom_call.1} parent=1 // pred_check
      _
    $region3: #{tpu_custom_call.1} parent=1 // pred_check_branch
      %9 = sbr.rel (0) target = $region5
    $region4: #{tpu_custom_call.1} parent=1 // pred_region
      %11 = vsyncadd [#allocation3], 0
      %s13 = sshll.u32 %s0, 4
      %s14 = int_to_ptr.hbm [resolvable:$true] %s13
      %s15 = sshll.u32 [#allocation2], 4
      %s16 = int_to_ptr.vmem [resolvable:$true] %s15
      %18 = dma.hbm_to_vmem [thread:$0]  %s14, 256, %s16, [#allocation3]
    $region5: #{tpu_custom_call.1} parent=1 // pred_fallthru
      _
    // Predicated region
    $region6: #{tpu_custom_call.1} parent=1 // pred_check
      _
    $region7: #{tpu_custom_call.1} parent=1 // pred_check_branch
      %20 = sbr.rel (0) target = $region9
    $region8: #{tpu_custom_call.1} parent=1 // pred_region
      %22 = dma.done [#allocation3], 256
    $region9: #{tpu_custom_call.1} parent=1 // pred_fallthru
      _
    %v23 = vld [vmem:[#allocation2] sm:$0xff]
    %v24 = vld [vmem:[#allocation2 + $0x8] sm:$0xff]
    %v25 = vxor.u32 %v23, 2147483648
    %v26 = vxor.u32 %v24, 2147483648
    %v27 = vmul.f32 %v25, 1.442695
    %v28 = vpow.pop %v27
    %v29 = vmul.f32 %v26, 1.442695
    %v30 = vpow.pop %v29
    %v31 = vadd.f32 %v28, 1.0
    %v32 = vadd.f32 %v30, 1.0
    %v33 = vrcp.pop %v31
    %v34 = vmul.f32 %v31, %v33
    %v35 = vsub.f32 1.0, %v34
    %v36 = vmul.f32 %v33, %v35
    %v37 = vadd.f32 %v33, %v36
    %vm38 = vweird.f32 %v31
    %vm39 = vweird.f32 %v33
    %vm40 = vmor %vm38, %vm39
    %v41 = vsel %vm40, %v33, %v37
    %v42 = vand.u32 2147483647, %v31
    %vm43 = vcmp.eq.f32.partialorder %v42, 8.507059e+37
    %v44 = vand.u32 %v31, 2147483648
    %v45 = vor.u32 1.1754944e-38, %v44
    %v46 = vsel %vm43, %v45, %v41
    %v47 = vmul.f32 1.0, %v46
    %v48 = vrcp.pop %v32
    %v49 = vmul.f32 %v32, %v48
    %v50 = vsub.f32 1.0, %v49
    %v51 = vmul.f32 %v48, %v50
    %v52 = vadd.f32 %v48, %v51
    %vm53 = vweird.f32 %v32
    %vm54 = vweird.f32 %v48
    %vm55 = vmor %vm53, %vm54
    %v56 = vsel %vm55, %v48, %v52
    %v57 = vand.u32 2147483647, %v32
    %vm58 = vcmp.eq.f32.partialorder %v57, 8.507059e+37
    %v59 = vand.u32 %v32, 2147483648
    %v60 = vor.u32 1.1754944e-38, %v59
    %v61 = vsel %vm58, %v60, %v56
    %v62 = vmul.f32 1.0, %v61
    %v63 = vmul.f32 %v23, %v47
    %v64 = vmul.f32 %v24, %v62
    %65 = vst [vmem:[#allocation5] sm:$0xff] %v63
    %66 = vst [vmem:[#allocation5 + $0x8] sm:$0xff] %v64
    // Predicated region
    $region10: #{tpu_custom_call.1} parent=1 // pred_check
      _
    $region11: #{tpu_custom_call.1} parent=1 // pred_check_branch
      %68 = sbr.rel (0) target = $region13
    $region12: #{tpu_custom_call.1} parent=1 // pred_region
      %70 = vsyncadd [#allocation4], 0
      %s72 = sshll.u32 [#allocation5], 4
      %s73 = int_to_ptr.vmem [resolvable:$true] %s72
      %s74 = sshll.u32 %s1, 4
      %s75 = int_to_ptr.hbm [resolvable:$true] %s74
      %77 = dma.vmem_to_hbm [thread:$0]  %s73, 256, %s75, [#allocation4]
    $region13: #{tpu_custom_call.1} parent=1 // pred_fallthru
      _
    // Predicated region
    $region14: #{tpu_custom_call.1} parent=1 // pred_check
      _
    $region15: #{tpu_custom_call.1} parent=1 // pred_check_branch
      %79 = sbr.rel (0) target = $region17
    $region16: #{tpu_custom_call.1} parent=1 // pred_region
      %81 = dma.done [#allocation4], 256
    $region17: #{tpu_custom_call.1} parent=1 // pred_fallthru
      _
    %82 = vsyncpa [#allocation3], 1
    %83 = vsyncpa [#allocation4], 1

</llo_original>
